<compile_context>
chip_gen: v7x
topology: tpu7x:2x2x1
jax: 0.10.0
libtpu: 0.0.40
codegen_flags: <defaults>
</compile_context>

<pallas_src>
import functools
import math

import jax
import jax.numpy as jnp
from jax.experimental import pallas as pl
from jax.experimental.pallas import tpu as pltpu

_LANES = 128
_SUBLANES = 8

# Per-grid-step row tiles (sweepable).  Sized so double-buffered streams stay
# inside every generation's VMEM (v7x: 64 MiB physical):
#   reduce path     : 2 inputs  x 2 bufs x 8192 x 128 x 4B = 16 MiB
#   elementwise path: 3 streams x 2 bufs x 4096 x 128 x 4B = 12 MiB
_MAX_BLOCK_ROWS_REDUCE = 8192
_MAX_BLOCK_ROWS_ELEMWISE = 4096

# Shard the serial reduction across TensorCores (2 TCs on v7x via the
# "parallel" leading grid axis; just an extra loop level on v5e/v6e).
_NUM_CORE_SPLITS = 2

# Above the 16/32 MiB scoped defaults on v5e/v6e, below v7x's 64 MiB physical.
_VMEM_LIMIT_BYTES = 48 * 1024 * 1024


# -------------------- small static helpers --------------------

def _cdiv(a, b):
    return -(-a // b)


def _round_up(a, b):
    return _cdiv(a, b) * b


def _sublane_multiple(dtype):
    """Min row multiple so blocks respect sublane packing (8 f32 / 16 bf16)."""
    itemsize = jnp.dtype(dtype).itemsize
    return _SUBLANES * max(1, 4 // itemsize)


def _choose_tiling(n, dtype, max_block_rows, num_splits):
    """Pick (block_rows, num_blocks) with num_blocks % num_splits == 0 and
    block_rows a sublane multiple; padding overhead stays tiny for large n."""
    sub = _sublane_multiple(dtype)
    rows_needed = max(_cdiv(n, _LANES), 1)
    num_blocks = _round_up(_cdiv(rows_needed, max_block_rows), num_splits)
    block_rows = _round_up(_cdiv(rows_needed, num_blocks), sub)
    return block_rows, num_blocks


def _to_slab(x, block_rows, num_blocks):
    """Flatten to (block_rows * num_blocks, 128); pad only if needed."""
    rows = block_rows * num_blocks
    padded_n = rows * _LANES
    flat = x.reshape(-1)
    n = flat.shape[0]
    if padded_n != n:  # static check: skip the padded copy when aligned
        flat = jnp.pad(flat, (0, padded_n - n))
    return flat.reshape(rows, _LANES)


# -------------------- kernels --------------------

def _mse_sum_kernel(x_ref, y_ref, o_ref):
    """Accumulate per-(sublane,lane) partial sums of (x - y)^2 into the
    resident (8, 128) output block of this core-split.  Pure VPU adds per
    step; the tiny final cross-lane reduce happens in the wrapper."""
    @pl.when(pl.program_id(1) == 0)
    def _():
        o_ref[...] = jnp.zeros_like(o_ref)

    d = x_ref[...].astype(jnp.float32) - y_ref[...].astype(jnp.float32)
    o_ref[...] += jnp.sum((d * d).reshape(-1, _SUBLANES, _LANES), axis=0)


def _mse_elementwise_kernel(x_ref, y_ref, o_ref):
    """Elementwise (x - y)^2 (reduce=False path)."""
    d = x_ref[...].astype(jnp.float32) - y_ref[...].astype(jnp.float32)
    o_ref[...] = (d * d).astype(o_ref.dtype)


# -------------------- wrapper --------------------

@functools.partial(jax.jit, static_argnames=("size_average", "reduce"))
def mse_loss(x, y, *, size_average=True, reduce=True):
    assert x.shape == y.shape, "input and target must have the same shape"
    n = math.prod(x.shape)

    if reduce:
        block_rows, num_blocks = _choose_tiling(
            n, x.dtype, _MAX_BLOCK_ROWS_REDUCE, _NUM_CORE_SPLITS)
        blocks_per_split = num_blocks // _NUM_CORE_SPLITS
        x2d = _to_slab(x, block_rows, num_blocks)
        y2d = _to_slab(y, block_rows, num_blocks)

        in_map = lambda c, i, bps=blocks_per_split: (c * bps + i, 0)

        partials = pl.pallas_call(
            _mse_sum_kernel,
            out_shape=jax.ShapeDtypeStruct(
                (_NUM_CORE_SPLITS * _SUBLANES, _LANES), jnp.float32),
            grid_spec=pltpu.PrefetchScalarGridSpec(
                num_scalar_prefetch=0,
                grid=(_NUM_CORE_SPLITS, blocks_per_split),
                in_specs=[
                    pl.BlockSpec((block_rows, _LANES), in_map),
                    pl.BlockSpec((block_rows, _LANES), in_map),
                ],
                out_specs=pl.BlockSpec((_SUBLANES, _LANES),
                                       lambda c, i: (c, 0)),
            ),
            compiler_params=pltpu.CompilerParams(
                dimension_semantics=("parallel", "arbitrary"),
                vmem_limit_bytes=_VMEM_LIMIT_BYTES),
        )(x2d, y2d)

        total = jnp.sum(partials)  # tiny (16,128) f32 reduce outside the kernel
        if size_average:
            total = total / jnp.float32(n)
        return total.astype(x.dtype)

    # reduce=False: per-element squared error, same shape as input.
    block_rows, num_blocks = _choose_tiling(
        n, x.dtype, _MAX_BLOCK_ROWS_ELEMWISE, 1)
    rows = block_rows * num_blocks
    x2d = _to_slab(x, block_rows, num_blocks)
    y2d = _to_slab(y, block_rows, num_blocks)

    sq = pl.pallas_call(
        _mse_elementwise_kernel,
        out_shape=jax.ShapeDtypeStruct((rows, _LANES), x.dtype),
        grid_spec=pltpu.PrefetchScalarGridSpec(
            num_scalar_prefetch=0,
            grid=(num_blocks,),
            in_specs=[
                pl.BlockSpec((block_rows, _LANES), lambda i: (i, 0)),
                pl.BlockSpec((block_rows, _LANES), lambda i: (i, 0)),
            ],
            out_specs=pl.BlockSpec((block_rows, _LANES), lambda i: (i, 0)),
        ),
        compiler_params=pltpu.CompilerParams(
            dimension_semantics=("parallel",),
            vmem_limit_bytes=_VMEM_LIMIT_BYTES),
    )(x2d, y2d)

    out = sq.reshape(-1)
    if out.shape[0] != n:
        out = out[:n]
    return out.reshape(x.shape)


class MSELoss:
    """JAX/Pallas equivalent of torch.nn.MSELoss (forward only)."""

    def __init__(self, size_average=True, reduce=True):
        self.size_average = size_average
        self.reduce = reduce

    def __call__(self, input, target):
        return mse_loss(input, target,
                        size_average=self.size_average,
                        reduce=self.reduce)


if __name__ == "__main__":
    key = jax.random.PRNGKey(0)
    kx, ky = jax.random.split(key)
    # NCHW-style small input: batch=2, channels=4, spatial=16x16
    x = jax.random.normal(kx, (2, 4, 16, 16), dtype=jnp.float32)
    y = jax.random.normal(ky, (2, 4, 16, 16), dtype=jnp.float32)

    # Default: size_average=True, reduce=True  -> mean of squared error
    loss = MSELoss()(x, y)
    jax.block_until_ready(loss)

    # Other modes.
    loss_sum = MSELoss(size_average=False)(x, y)
    loss_elem = MSELoss(reduce=False)(x, y)
    jax.block_until_ready((loss_sum, loss_elem))

    # Reference checks (plain JAX)
    ref_mean = jnp.mean((x - y) ** 2)
    ref_sum = jnp.sum((x - y) ** 2)
    ref_elem = (x - y) ** 2
    assert jnp.allclose(loss, ref_mean, rtol=1e-5, atol=1e-5)
    assert jnp.allclose(loss_sum, ref_sum, rtol=1e-5, atol=1e-4)
    assert jnp.allclose(loss_elem, ref_elem, rtol=1e-5, atol=1e-5)
    assert loss_elem.shape == x.shape

    # Odd shape exercising the padded-tail path (torch docs example 3x5).
    xs = jax.random.normal(kx, (3, 5), dtype=jnp.float32)
    ys = jax.random.normal(ky, (3, 5), dtype=jnp.float32)
    loss_small = MSELoss()(xs, ys)
    loss_small_elem = MSELoss(reduce=False)(xs, ys)
    jax.block_until_ready((loss_small, loss_small_elem))
    assert jnp.allclose(loss_small, jnp.mean((xs - ys) ** 2),
                        rtol=1e-5, atol=1e-5)
    assert jnp.allclose(loss_small_elem, (xs - ys) ** 2,
                        rtol=1e-5, atol=1e-5)
    assert loss_small_elem.shape == xs.shape

    # bf16 inputs (exercises the 16-sublane packing path).
    xb = x.astype(jnp.bfloat16)
    yb = y.astype(jnp.bfloat16)
    loss_bf16 = MSELoss()(xb, yb)
    jax.block_until_ready(loss_bf16)
    ref_bf16 = jnp.mean((xb.astype(jnp.float32) - yb.astype(jnp.float32)) ** 2)
    assert jnp.allclose(loss_bf16.astype(jnp.float32), ref_bf16,
                        rtol=2e-2, atol=2e-2)

    print("KERNEL_OK")
</pallas_src>

<mosaic_0001>
module attributes {stable_mosaic.version = 11 : i64} {
  func.func @_mse_sum_kernel(%arg0: i32, %arg1: i32, %arg2: memref<8x128xf32, #tpu.memory_space<vmem>>, %arg3: memref<8x128xf32, #tpu.memory_space<vmem>>, %arg4: memref<8x128xf32, #tpu.memory_space<vmem>>) attributes {dimension_semantics = [#tpu.dimension_semantics<parallel>, #tpu.dimension_semantics<arbitrary>], iteration_bounds = array<i64: 2, 1>, scalar_prefetch = 0 : i64, scratch_operands = 0 : i64, tpu.core_type = #tpu.core_type<tc>, window_params = [{transform_indices = @transform_0, window_bounds = array<i64: 8, 128>}, {transform_indices = @transform_1, window_bounds = array<i64: 8, 128>}, {transform_indices = @transform_2, window_bounds = array<i64: 8, 128>}]} {
    %c0_i32 = arith.constant 0 : i32
    %0 = arith.cmpi eq, %arg1, %c0_i32 : i32
    %1 = arith.extui %0 : i1 to i32
    %c0_i32_0 = arith.constant 0 : i32
    %2 = arith.cmpi ne, %1, %c0_i32_0 : i32
    scf.if %2 {
      %cst_8 = arith.constant 0.000000e+00 : f32
      %12 = vector.broadcast %cst_8 : f32 to vector<8x128xf32>
      %c0_9 = arith.constant 0 : index
      %c0_10 = arith.constant 0 : index
      %13 = vector.load %arg4[%c0_9, %c0_10] : memref<8x128xf32, #tpu.memory_space<vmem>>, vector<8x128xf32>
      tpu.vector_store %arg4[%c0_9, %c0_10], %12 {strides = array<i32>} : memref<8x128xf32, #tpu.memory_space<vmem>>, vector<8x128xf32>,
    } else {
    }
    %c0 = arith.constant 0 : index
    %c0_1 = arith.constant 0 : index
    %3 = vector.load %arg2[%c0, %c0_1] : memref<8x128xf32, #tpu.memory_space<vmem>>, vector<8x128xf32>
    %c0_2 = arith.constant 0 : index
    %c0_3 = arith.constant 0 : index
    %4 = vector.load %arg3[%c0_2, %c0_3] : memref<8x128xf32, #tpu.memory_space<vmem>>, vector<8x128xf32>
    %5 = arith.subf %3, %4 : vector<8x128xf32>
    %c0_4 = arith.constant 0 : index
    %c0_5 = arith.constant 0 : index
    %6 = vector.load %arg4[%c0_4, %c0_5] : memref<8x128xf32, #tpu.memory_space<vmem>>, vector<8x128xf32>
    %7 = arith.mulf %5, %5 : vector<8x128xf32>
    %8 = vector.shape_cast %7 : vector<8x128xf32> to vector<1x8x128xf32>
    %cst = arith.constant dense<0.000000e+00> : vector<8x128xf32>
    %9 = vector.multi_reduction <add>, %8, %cst [0] : vector<1x8x128xf32> to vector<8x128xf32>
    %10 = arith.addf %6, %9 : vector<8x128xf32>
    %c0_6 = arith.constant 0 : index
    %c0_7 = arith.constant 0 : index
    %11 = vector.load %arg4[%c0_6, %c0_7] : memref<8x128xf32, #tpu.memory_space<vmem>>, vector<8x128xf32>
    tpu.vector_store %arg4[%c0_6, %c0_7], %10 {strides = array<i32>} : memref<8x128xf32, #tpu.memory_space<vmem>>, vector<8x128xf32>,
    return
  }
  func.func @transform_0(%arg0: i32, %arg1: i32) -> (i32, i32) {
    %c1_i32 = arith.constant 1 : i32
    %0 = arith.muli %arg0, %c1_i32 : i32
    %1 = arith.addi %0, %arg1 : i32
    %c0_i32 = arith.constant 0 : i32
    %c0_i32_0 = arith.constant 0 : i32
    return %1, %c0_i32 : i32, i32
  }
  func.func @transform_1(%arg0: i32, %arg1: i32) -> (i32, i32) {
    %c1_i32 = arith.constant 1 : i32
    %0 = arith.muli %arg0, %c1_i32 : i32
    %1 = arith.addi %0, %arg1 : i32
    %c0_i32 = arith.constant 0 : i32
    %c0_i32_0 = arith.constant 0 : i32
    return %1, %c0_i32 : i32, i32
  }
  func.func @transform_2(%arg0: i32, %arg1: i32) -> (i32, i32) {
    %c0_i32 = arith.constant 0 : i32
    %c0_i32_0 = arith.constant 0 : i32
    return %arg0, %c0_i32 : i32, i32
  }
}

</mosaic_0001>

<llo_original>
// kernel: mse_loss.1
$region0: #{mse_loss.1}
  #allocation0 [shape = 'u32[]', space=smem, size = 0x4, offset = 0x4, fixed_abs, tag = 'smem constant byte address 0x4 - core index']
  #allocation1 [shape = 'u32[144,128]{1,0:T(1,128)}', space=vmem, size = 0x12000, scoped, tag = 'internal scratch']
  %s0 = inlined_call_operand.vmem [shape: f32[16,128], index: 0, kind: input, shape index: {}]
  %s1 = inlined_call_operand.vmem [shape: f32[16,128], index: 1, kind: input, shape index: {}]
  %s2 = inlined_call_operand.vmem [shape: f32[16,128], index: 2, kind: output, shape index: {}]
  %s3 = sld [smem:[#allocation0]]
  $region45: #{mse_loss.1} parent=0
    _
  %s5 = ssub.s32 1, %s3
  %s6 = scalar_select 0, %s5, %s3
  loop: start=0, step=1, limit=4
  $region2: #{mse_loss.1} parent=0 // loop_pre_header
    _
  $region3: #{mse_loss.1} parent=0 // loop_header
    %s8 = sphi 0, %s12
    %p9 = scmp.ge.s32.totalorder %s8, 4
    %s15 = sphi 0, %s27
    %s16 = sphi 0, %s23
    %s17 = sphi 0, %s15
    %s18 = sphi 0, %s16
    %s19 = sphi 0, %s17
    %s20 = sphi 0, %s18
    %s32 = sphi 0, %s34
    %s35 = sphi 0, %s32
    %s36 = sphi 0, %s35
    %s52 = sphi 0, %s36
    %s60 = sphi 0, %s62
    %s63 = sphi 0, %s60
    %s64 = sphi 0, %s63
    %s80 = sphi 0, %s64
    %s86 = sphi 0, %s88
    %s89 = sphi 0, %s86
    %s90 = sphi 0, %s89
    %s106 = sphi 0, %s90
  $region4: #{mse_loss.1} parent=0 // loop_header_branch
    %11 = sbr.rel (%p9) target = $region8
  $region5: #{mse_loss.1} parent=0 // loop_body
    %s13 = ssub.s32 %s8, 1
    %s14 = ssub.s32 %s8, 2
    %s21 = sadd.s32 1, %s16
    %p22 = scmp.ge.s32.totalorder %s21, 1
    %s23 = scalar_select %p22, 0, %s21
    %s24 = sadd.s32 1, %s15
    %s25 = scalar_select %p22, %s24, %s15
    %p26 = scmp.ge.s32.totalorder %s25, 2
    %s27 = scalar_select %p26, 0, %s25
    %s28 = sadd.s32 %s15, %s16
    %s29 = sadd.s32 %s27, %s23
    %s30 = ssub.s32 %s28, %s29
    %p31 = scmp.eq.s32.totalorder %s30, 0
    %s33 = sadd.s32 %s32, 1
    %s34 = scalar_select %p31, %s32, %s33
    %p37 = pneg %p31
    %p38 = scmp.eq.s32.totalorder %s8, 1
    %p39 = por %p37, %p38
    %p40 = scmp.ne.s32.totalorder %s32, %s35
    %p41 = scmp.eq.s32.totalorder %s8, 0
    %p42 = por %p40, %p41
    %p43 = scmp.ne.s32.totalorder %s32, %s35
    %p44 = scmp.eq.s32.totalorder %s13, 1
    %p45 = por %p43, %p44
    %p46 = scmp.ne.s32.totalorder %s35, %s36
    %p47 = scmp.eq.s32.totalorder %s13, 0
    %p48 = por %p46, %p47
    %p49 = scmp.ne.s32.totalorder %s35, %s36
    %p50 = scmp.eq.s32.totalorder %s14, 1
    %p51 = por %p49, %p50
    %p53 = scmp.ne.s32.totalorder %s36, %s52
    %p54 = scmp.eq.s32.totalorder %s14, 0
    %p55 = por %p53, %p54
    %s56 = sadd.s32 %s15, %s16
    %s57 = sadd.s32 %s27, %s23
    %s58 = ssub.s32 %s56, %s57
    %p59 = scmp.eq.s32.totalorder %s58, 0
    %s61 = sadd.s32 %s60, 1
    %s62 = scalar_select %p59, %s60, %s61
    %p65 = pneg %p59
    %p66 = scmp.eq.s32.totalorder %s8, 1
    %p67 = por %p65, %p66
    %p68 = scmp.ne.s32.totalorder %s60, %s63
    %p69 = scmp.eq.s32.totalorder %s8, 0
    %p70 = por %p68, %p69
    %p71 = scmp.ne.s32.totalorder %s60, %s63
    %p72 = scmp.eq.s32.totalorder %s13, 1
    %p73 = por %p71, %p72
    %p74 = scmp.ne.s32.totalorder %s63, %s64
    %p75 = scmp.eq.s32.totalorder %s13, 0
    %p76 = por %p74, %p75
    %p77 = scmp.ne.s32.totalorder %s63, %s64
    %p78 = scmp.eq.s32.totalorder %s14, 1
    %p79 = por %p77, %p78
    %p81 = scmp.ne.s32.totalorder %s64, %s80
    %p82 = scmp.eq.s32.totalorder %s14, 0
    %p83 = por %p81, %p82
    %s84 = ssub.s32 %s15, %s27
    %p85 = scmp.eq.s32.totalorder %s84, 0
    %s87 = sadd.s32 %s86, 1
    %s88 = scalar_select %p85, %s86, %s87
    %p91 = pneg %p85
    %p92 = scmp.eq.s32.totalorder %s8, 1
    %p93 = por %p91, %p92
    %p94 = scmp.ne.s32.totalorder %s86, %s89
    %p95 = scmp.eq.s32.totalorder %s8, 0
    %p96 = por %p94, %p95
    %p97 = scmp.ne.s32.totalorder %s86, %s89
    %p98 = scmp.eq.s32.totalorder %s13, 1
    %p99 = por %p97, %p98
    %p100 = scmp.ne.s32.totalorder %s89, %s90
    %p101 = scmp.eq.s32.totalorder %s13, 0
    %p102 = por %p100, %p101
    %p103 = scmp.ne.s32.totalorder %s89, %s90
    %p104 = scmp.eq.s32.totalorder %s14, 1
    %p105 = por %p103, %p104
    %p107 = scmp.ne.s32.totalorder %s90, %s106
    %p108 = scmp.eq.s32.totalorder %s14, 0
    %p109 = por %p107, %p108
    %p110 = scmp.le.s32.totalorder 1, %s8
    %p111 = scmp.lt.s32.totalorder %s8, 3
    %p112 = pnand %p110, %p111
    %p113 = pneg %p112
    // Predicated region
    $region9: #{mse_loss.1} parent=5 // pred_check
      _
    $region10: #{mse_loss.1} parent=5 // pred_check_branch
      %115 = sbr.rel (%p112) target = $region12
    $region11: #{mse_loss.1} parent=5 // pred_region
      %s116 = ssub.s32 %s8, 1
    $region12: #{mse_loss.1} parent=5 // pred_fallthru
      _
    %p117 = scmp.lt.s32.totalorder %s8, 2
    // Predicated region
    $region13: #{mse_loss.1} parent=5 // pred_check
      %p118 = pneg %p117
    $region14: #{mse_loss.1} parent=5 // pred_check_branch
      %120 = sbr.rel (%p118) target = $region16
    $region15: #{mse_loss.1} parent=5 // pred_region
      // Predicated region
      $region17: #{mse_loss.1} parent=15 // pred_check
        %p121 = pneg %p42
      $region18: #{mse_loss.1} parent=15 // pred_check_branch
        %123 = sbr.rel (%p121) target = $region20
      $region19: #{mse_loss.1} parent=15 // pred_region
        %s124 = sadd.s32 %s15, %s16
        %p125 = scmp.lt.s32.totalorder %s124, 1
        %s126 = scalar_select %p125, %s124, 1
        %s127 = smul.addr %s126, 8
        %s128 = scalar_lea.vmem %s0, %s127
        %s129 = sadd.s32 %s15, %s16
      $region20: #{mse_loss.1} parent=15 // pred_fallthru
        _
      // Predicated region
      $region21: #{mse_loss.1} parent=15 // pred_check
        %p130 = pneg %p70
      $region22: #{mse_loss.1} parent=15 // pred_check_branch
        %132 = sbr.rel (%p130) target = $region24
      $region23: #{mse_loss.1} parent=15 // pred_region
        %s133 = sadd.s32 %s15, %s16
        %p134 = scmp.lt.s32.totalorder %s133, 1
        %s135 = scalar_select %p134, %s133, 1
        %s136 = smul.addr %s135, 8
        %s137 = scalar_lea.vmem %s1, %s136
        %s138 = sadd.s32 %s15, %s16
      $region24: #{mse_loss.1} parent=15 // pred_fallthru
        _
    $region16: #{mse_loss.1} parent=5 // pred_fallthru
      _
    %p139 = scmp.le.s32.totalorder 1, %s8
    %p140 = scmp.lt.s32.totalorder %s8, 3
    %p141 = pnand %p139, %p140
    %p142 = pneg %p141
    // Predicated region
    $region25: #{mse_loss.1} parent=5 // pred_check
      _
    $region26: #{mse_loss.1} parent=5 // pred_check_branch
      %144 = sbr.rel (%p141) target = $region28
    $region27: #{mse_loss.1} parent=5 // pred_region
      %s145 = ssub.s32 %s8, 1
      %s146 = sadd.s32 %s17, %s18
      %p147 = scmp.lt.s32.totalorder %s146, 1
      %s148 = scalar_select %p147, %s146, 1
      %s149 = smul.addr %s148, 8
      %s150 = scalar_lea.vmem %s0, %s149
      %p151 = pneg %p48
      %p152 = pneg %p45
      %s153 = sadd.s32 %s17, %s18
      %p154 = scmp.lt.s32.totalorder %s153, 1
      %s155 = scalar_select %p154, %s153, 1
      %s156 = smul.addr %s155, 8
      %s157 = scalar_lea.vmem %s1, %s156
      %p158 = pneg %p76
      %p159 = pneg %p73
      %p160 = pneg %p102
      %p161 = pneg %p99
      %p162 = scmp.lt.s32.totalorder %s17, 1
      %s163 = scalar_select %p162, %s17, 1
      %s164 = smul.addr %s163, 8
      %s165 = scalar_lea.vmem %s2, %s164
      %s166 = sadd.s32 %s17, %s18
      %p167 = scmp.lt.s32.totalorder %s166, 1
      %s168 = scalar_select %p167, %s166, 1
      %s169 = smul.addr %s168, 8
      %s170 = scalar_lea.vmem %s0, %s169
      %s171 = sadd.s32 %s17, %s18
      %s172 = sadd.s32 %s17, %s18
      %p173 = scmp.lt.s32.totalorder %s172, 1
      %s174 = scalar_select %p173, %s172, 1
      %s175 = smul.addr %s174, 8
      %s176 = scalar_lea.vmem %s1, %s175
      %s177 = sadd.s32 %s17, %s18
      %p178 = scmp.lt.s32.totalorder %s17, 1
      %s179 = scalar_select %p178, %s17, 1
      %s180 = smul.addr %s179, 8
      %s181 = scalar_lea.vmem %s2, %s180
      %p182 = scmp.eq.s32.totalorder %s18, 0
      // Predicated region
      $region29: #{mse_loss.1} parent=27 // pred_check
        %p183 = pneg %p182
      $region30: #{mse_loss.1} parent=27 // pred_check_branch
        %185 = sbr.rel (%p183) target = $region32
      $region31: #{mse_loss.1} parent=27 // pred_region
        %186 = vst [vmem:[%s181] sm:$0xff] 0.0
      $region32: #{mse_loss.1} parent=27 // pred_fallthru
        _
      %v187 = vld [vmem:[%s170] sm:$0xff]
      %v188 = vld [vmem:[%s176] sm:$0xff]
      %v189 = vsub.f32 %v187, %v188
      %v190 = vld [vmem:[%s181] sm:$0xff]
      %v191 = vmul.f32 %v189, %v189
      %v192 = vadd.f32 %v191, 0.0
      %v193 = vadd.f32 %v190, %v192
      %194 = vst [vmem:[%s181] sm:$0xff] %v193
      %p195 = scmp.lt.s32.totalorder %s17, 1
      %s196 = scalar_select %p195, %s17, 1
      %s197 = smul.addr %s196, 8
      %s198 = scalar_lea.vmem %s2, %s197
      // Predicated region
      $region33: #{mse_loss.1} parent=27 // pred_check
        %p199 = pneg %p99
      $region34: #{mse_loss.1} parent=27 // pred_check_branch
        %201 = sbr.rel (%p199) target = $region36
      $region35: #{mse_loss.1} parent=27 // pred_region
        _
      $region36: #{mse_loss.1} parent=27 // pred_fallthru
        _
    $region28: #{mse_loss.1} parent=5 // pred_fallthru
      _
    %p202 = scmp.le.s32.totalorder 2, %s8
    // Predicated region
    $region37: #{mse_loss.1} parent=5 // pred_check
      %p203 = pneg %p202
    $region38: #{mse_loss.1} parent=5 // pred_check_branch
      %205 = sbr.rel (%p203) target = $region40
    $region39: #{mse_loss.1} parent=5 // pred_region
      %s206 = ssub.s32 %s8, 2
      // Predicated region
      $region41: #{mse_loss.1} parent=39 // pred_check
        %p207 = pneg %p105
      $region42: #{mse_loss.1} parent=39 // pred_check_branch
        %209 = sbr.rel (%p207) target = $region44
      $region43: #{mse_loss.1} parent=39 // pred_region
        %p210 = scmp.lt.s32.totalorder %s19, 1
        %s211 = scalar_select %p210, %s19, 1
        %s212 = smul.addr %s211, 8
        %s213 = scalar_lea.vmem %s2, %s212
      $region44: #{mse_loss.1} parent=39 // pred_fallthru
        _
    $region40: #{mse_loss.1} parent=5 // pred_fallthru
      _
  $region6: #{mse_loss.1} parent=0 // loop_footer
    %s12 = sadd.s32 1, %s8
  $region7: #{mse_loss.1} parent=0 // loop_footer_branch
    %7 = sbr.rel target = $region3
  $region8: #{mse_loss.1} parent=0 // loop_exit
    _

</llo_original>
